<compile_context>
chip_gen: v7x
topology: tpu7x:2x2x1
jax: 0.10.0
libtpu: 0.0.40
codegen_flags: <defaults>
</compile_context>

<pallas_src>
import functools

import jax
import jax.numpy as jnp
from jax.experimental import pallas as pl
from jax.experimental.pallas import tpu as pltpu


_LANE = 128


def _cdiv(a, b):
    return -(-a // b)


def _round_up(a, b):
    return _cdiv(a, b) * b


def _vmem_budgets():
    """(input_block_budget_bytes, vmem_limit_bytes), generation-aware."""
    vmem_bytes = 64 * 1024 * 1024            # conservative default (v7x-sized)
    try:
        info = pltpu.get_tpu_info()
        cap = int(getattr(info, "vmem_capacity_bytes", 0))
        if cap >= 16 * 1024 * 1024:
            vmem_bytes = cap
    except Exception:
        pass
    input_budget = (vmem_bytes * 55) // 100  # 2 inputs x 2 buffers (+ temps)
    vmem_limit = min((vmem_bytes * 85) // 100, vmem_bytes - (8 << 20))
    return int(input_budget), int(vmem_limit)


def _block_row_bytes(cols, itemsize):
    """VMEM bytes per block row: 2 inputs x 2 pipeline buffers in the input
    dtype plus ~2 full-width f32 intermediates from the cast/sub/square chain
    (conservative so enlarged tiles never trip the vmem limit)."""
    padded_cols = _round_up(cols, _LANE)
    return padded_cols * (4 * itemsize + 2 * 4)


def _choose_tiles(B, D, itemsize):
    """Pick (block_rows, block_cols, vmem_limit_bytes)."""
    pack = max(8, 32 // itemsize)            # sublane pack: f32=8, bf16=16, i8=32
    input_budget, vmem_limit = _vmem_budgets()

    # --- common case: full-D row blocks ------------------------------------
    max_tb = (input_budget // _block_row_bytes(D, itemsize)) // pack * pack
    if max_tb >= pack:
        if B <= pack:
            return B, D, vmem_limit
        nb = max(2, _cdiv(B, max_tb))        # >= 2 blocks: both v7x TCs stream
        if nb % 2:
            nb += 1                          # even block count: no idle-TC tail
        tb = min(max_tb, _round_up(_cdiv(B, nb), pack))
        return tb, D, vmem_limit

    # --- very wide rows: chunk the feature (reduction) axis ----------------
    tb = B if B <= pack else min(_round_up(_cdiv(B, 2), pack), 256)
    per_col = tb * (4 * itemsize + 2 * 4)
    td = max(_LANE, (input_budget // max(per_col, 1)) // _LANE * _LANE)
    if D % _LANE == 0 and D % td != 0:
        # Prefer a chunk size that divides D (skips last-chunk masking) when it
        # costs at most 2x more steps.
        m = D // _LANE
        best = _LANE
        d = 1
        while d * d <= m:
            if m % d == 0:
                for dd in (d, m // d):
                    cand = dd * _LANE
                    if cand <= td and cand > best:
                        best = cand
            d += 1
        if best * 2 >= td:
            td = best
    if td >= D:
        td = D                               # never overrun D with a single chunk
    return tb, td, vmem_limit


def _sqdist_kernel(d_total, td, nk, o1_ref, o2_ref, dist_ref):
    """Per-row squared L2 distance, optionally accumulated over D chunks."""
    diff = o2_ref[...].astype(jnp.float32) - o1_ref[...].astype(jnp.float32)

    if nk == 1:
        dist_ref[...] = jnp.sum(diff * diff, axis=1, keepdims=True)
        return

    k = pl.program_id(1)
    if d_total % td != 0:
        # Ragged last feature chunk: zero the out-of-range columns.
        col = jax.lax.broadcasted_iota(jnp.int32, diff.shape, 1) + k * td
        diff = jnp.where(col < d_total, diff, 0.0)
    partial = jnp.sum(diff * diff, axis=1, keepdims=True)

    @pl.when(k == 0)
    def _():
        dist_ref[...] = partial

    @pl.when(k > 0)
    def _():
        dist_ref[...] = dist_ref[...] + partial


def contrastive_loss(output1, output2, target, *, margin=1.0, eps=1e-9,
                     block_rows=None, block_cols=None):
    """Pallas TPU implementation of ContrastiveLoss.forward.

    Args:
      output1, output2: (B, D) embeddings (f32 or bf16; streamed in their
                        native dtype, cast to f32 inside the kernel).
      target:           (B,) labels (1 = similar, 0 = dissimilar).
    Returns:
      (loss_mean: scalar f32, distances: (B,) f32)
    """
    B, D = output1.shape
    assert output2.shape == (B, D), (output1.shape, output2.shape)
    itemsize = jnp.dtype(output1.dtype).itemsize

    tb, td, vmem_limit = _choose_tiles(B, D, itemsize)
    if block_rows is not None:
        tb = int(block_rows)
        assert tb == B or tb % 8 == 0, (B, tb)
    if block_cols is not None:
        td = int(block_cols)
        assert td == D or td % _LANE == 0, (D, td)
    nb = _cdiv(B, tb)
    nk = _cdiv(D, td)

    kernel = functools.partial(_sqdist_kernel, D, td, nk)

    dist2d = pl.pallas_call(
        kernel,
        out_shape=jax.ShapeDtypeStruct((B, 1), jnp.float32),
        grid=(nb, nk),
        in_specs=[
            pl.BlockSpec((tb, td), lambda i, k: (i, k)),
            pl.BlockSpec((tb, td), lambda i, k: (i, k)),
        ],
        out_specs=pl.BlockSpec((tb, 1), lambda i, k: (i, 0)),
        compiler_params=pltpu.CompilerParams(
            dimension_semantics=("parallel", "arbitrary"),
            vmem_limit_bytes=vmem_limit,
        ),
    )(output1, output2)

    distances = dist2d[:, 0]

    # Tiny (B,)-sized epilogue: label/hinge/loss/mean, fused by XLA.
    t = target.astype(jnp.float32)
    hinge = jnp.maximum(float(margin) - jnp.sqrt(distances + float(eps)), 0.0)
    losses = 0.5 * (t * distances + (1.0 - t) * hinge * hinge)
    return jnp.mean(losses), distances


def _reference(output1, output2, target, margin=1.0, eps=1e-9):
    o1 = output1.astype(jnp.float32)
    o2 = output2.astype(jnp.float32)
    distances = jnp.sum((o2 - o1) ** 2, axis=1)
    tf = target.astype(jnp.float32)
    hinge = jnp.maximum(margin - jnp.sqrt(distances + eps), 0.0)
    losses = 0.5 * (tf * distances + (1.0 - tf) * hinge ** 2)
    return losses.mean(), distances


if __name__ == "__main__":
    key = jax.random.PRNGKey(0)
    margin = 1.0

    def run_case(k, B, D, dtype=jnp.float32, rtol=1e-5, atol=1e-5, **kw):
        k1, k2, k3 = jax.random.split(k, 3)
        o1 = jax.random.normal(k1, (B, D), dtype=jnp.float32).astype(dtype)
        o2 = jax.random.normal(k2, (B, D), dtype=jnp.float32).astype(dtype)
        tg = jax.random.bernoulli(k3, 0.5, (B,)).astype(jnp.float32)
        loss, dist = contrastive_loss(o1, o2, tg, margin=margin, **kw)
        jax.block_until_ready((loss, dist))
        ref_loss, ref_dist = _reference(o1, o2, tg, margin=margin)
        assert jnp.allclose(loss, ref_loss, rtol=rtol, atol=atol), (B, D, loss, ref_loss)
        assert jnp.allclose(dist, ref_dist, rtol=rtol, atol=atol), (B, D, dtype)

    keys = jax.random.split(key, 5)
    # Single-block path (B <= sublane pack).
    run_case(keys[0], 8, 32)
    # Explicit multi-row-block path (4 blocks of 8 rows).
    run_case(keys[1], 32, 64, block_rows=8)
    # Ragged batch (B not a multiple of the row tile) -> OOB-clipped last block.
    run_case(keys[2], 20, 48)
    # Feature-chunked reduction path with a ragged, masked last chunk.
    run_case(keys[3], 16, 200, block_cols=128)
    # bf16 streaming path (cast to f32 inside the kernel).
    run_case(keys[4], 32, 64, dtype=jnp.bfloat16, rtol=1e-4, atol=1e-4)

    print("KERNEL_OK")
</pallas_src>

<mosaic_0001>
module attributes {stable_mosaic.version = 11 : i64} {
  func.func @_sqdist_kernel(%arg0: i32, %arg1: i32, %arg2: memref<8x32xf32, #tpu.memory_space<vmem>>, %arg3: memref<8x32xf32, #tpu.memory_space<vmem>>, %arg4: memref<8x1xf32, #tpu.memory_space<vmem>>) attributes {dimension_semantics = [#tpu.dimension_semantics<parallel>, #tpu.dimension_semantics<arbitrary>], iteration_bounds = array<i64: 1, 1>, scalar_prefetch = 0 : i64, scratch_operands = 0 : i64, tpu.core_type = #tpu.core_type<tc>, window_params = [{transform_indices = @transform_0, window_bounds = array<i64: 8, 32>}, {transform_indices = @transform_1, window_bounds = array<i64: 8, 32>}, {transform_indices = @transform_2, window_bounds = array<i64: 8, 1>}]} {
    %c0 = arith.constant 0 : index
    %c0_0 = arith.constant 0 : index
    %0 = vector.load %arg3[%c0, %c0_0] : memref<8x32xf32, #tpu.memory_space<vmem>>, vector<8x32xf32>
    %c0_1 = arith.constant 0 : index
    %c0_2 = arith.constant 0 : index
    %1 = vector.load %arg2[%c0_1, %c0_2] : memref<8x32xf32, #tpu.memory_space<vmem>>, vector<8x32xf32>
    %2 = arith.subf %0, %1 : vector<8x32xf32>
    %3 = arith.mulf %2, %2 : vector<8x32xf32>
    %cst = arith.constant dense<0.000000e+00> : vector<8xf32>
    %4 = vector.multi_reduction <add>, %3, %cst [1] : vector<8x32xf32> to vector<8xf32>
    %5 = vector.shape_cast %4 : vector<8xf32> to vector<8x1xf32>
    %c0_3 = arith.constant 0 : index
    %c0_4 = arith.constant 0 : index
    %6 = vector.load %arg4[%c0_3, %c0_4] : memref<8x1xf32, #tpu.memory_space<vmem>>, vector<8x1xf32>
    tpu.vector_store %arg4[%c0_3, %c0_4], %5 {strides = array<i32>} : memref<8x1xf32, #tpu.memory_space<vmem>>, vector<8x1xf32>,
    return
  }
  func.func @transform_0(%arg0: i32, %arg1: i32) -> (i32, i32) {
    %c0_i32 = arith.constant 0 : i32
    return %arg0, %arg1 : i32, i32
  }
  func.func @transform_1(%arg0: i32, %arg1: i32) -> (i32, i32) {
    %c0_i32 = arith.constant 0 : i32
    return %arg0, %arg1 : i32, i32
  }
  func.func @transform_2(%arg0: i32, %arg1: i32) -> (i32, i32) {
    %c0_i32 = arith.constant 0 : i32
    %c0_i32_0 = arith.constant 0 : i32
    return %arg0, %c0_i32 : i32, i32
  }
}

</mosaic_0001>

<llo_original>
// kernel: tpu_custom_call.1
$region0: #{tpu_custom_call.1}
  #allocation0 [shape = 'u32[]', space=smem, size = 0x4, offset = 0x4, fixed_abs, tag = 'smem constant byte address 0x4 - core index']
  #allocation1 [shape = 'u32[144,128]{1,0:T(1,128)}', space=vmem, size = 0x12000, scoped, tag = 'internal scratch']
  %s0 = inlined_call_operand.hbm [shape: f32[8,32], index: 0, kind: input, shape index: {}]
  %s1 = inlined_call_operand.hbm [shape: f32[8,32], index: 1, kind: input, shape index: {}]
  %s2 = inlined_call_operand.vmem [shape: f32[8,1], index: 2, kind: output, shape index: {}]
  %s3 = sld [smem:[#allocation0]]
  $region26: #{tpu_custom_call.1} parent=0
    _
  %s5 = ssub.s32 1, %s3
  %s6 = scalar_select 0, %s5, %s3
  $region1: #{tpu_custom_call.1} parent=0
    #allocation2 [shape = 'u8[4096]{0}', space=vmem, size = 0x1000, scoped, tag = 'input window, operand 0, single buffered']
    #allocation3 [shape = 's32[1]{0}', space=sflag, size = 0x4, scoped, tag = 'scoped memory for tpu_custom_call.1']
    #allocation4 [shape = 'u8[4096]{0}', space=vmem, size = 0x1000, scoped, tag = 'input window, operand 1, single buffered']
    #allocation5 [shape = 's32[1]{0}', space=sflag, size = 0x4, scoped, tag = 'scoped memory for tpu_custom_call.1']
    %7 = vsyncpa [#allocation3], 0
    %8 = vsyncpa [#allocation5], 0
    // Predicated region
    $region2: #{tpu_custom_call.1} parent=1 // pred_check
      _
    $region3: #{tpu_custom_call.1} parent=1 // pred_check_branch
      %10 = sbr.rel (0) target = $region5
    $region4: #{tpu_custom_call.1} parent=1 // pred_region
      %s12 = ssub.s32 128, 128
      %13 = vsyncadd [#allocation3], %s12
      %s15 = sshll.u32 [#allocation2], 4
      %s16 = int_to_ptr.vmem [resolvable:$true] %s15
      %18 = dma.hbm_to_vmem [thread:$0]  %s0, 128, %s16, [#allocation3]
    $region5: #{tpu_custom_call.1} parent=1 // pred_fallthru
      _
    // Predicated region
    $region6: #{tpu_custom_call.1} parent=1 // pred_check
      _
    $region7: #{tpu_custom_call.1} parent=1 // pred_check_branch
      %20 = sbr.rel (0) target = $region9
    $region8: #{tpu_custom_call.1} parent=1 // pred_region
      %s22 = ssub.s32 128, 128
      %23 = vsyncadd [#allocation5], %s22
      %s25 = sshll.u32 [#allocation4], 4
      %s26 = int_to_ptr.vmem [resolvable:$true] %s25
      %28 = dma.hbm_to_vmem [thread:$0]  %s1, 128, %s26, [#allocation5]
    $region9: #{tpu_custom_call.1} parent=1 // pred_fallthru
      _
    // Predicated region
    $region10: #{tpu_custom_call.1} parent=1 // pred_check
      _
    $region11: #{tpu_custom_call.1} parent=1 // pred_check_branch
      %30 = sbr.rel (0) target = $region13
    $region12: #{tpu_custom_call.1} parent=1 // pred_region
      %31 = dma.done [#allocation3], 128
    $region13: #{tpu_custom_call.1} parent=1 // pred_fallthru
      _
    // Predicated region
    $region14: #{tpu_custom_call.1} parent=1 // pred_check
      _
    $region15: #{tpu_custom_call.1} parent=1 // pred_check_branch
      %33 = sbr.rel (0) target = $region17
    $region16: #{tpu_custom_call.1} parent=1 // pred_region
      %34 = dma.done [#allocation5], 128
    $region17: #{tpu_custom_call.1} parent=1 // pred_fallthru
      _
    %v35 = vld [vmem:[#allocation4] sm:$0xff]
    %v36 = vld [vmem:[#allocation2] sm:$0xff]
    %v37 = vsub.f32 %v35, %v36
    %v38 = vmul.f32 %v37, %v37
    %vm39 = vcmask 261120
    %v40 = vsel %vm39, %v38, 0.0
    %41 = vadd.xlane.f32.xlu0 %v40
    %v42 = vpop.xlane.xlu0 %41
    %vm43 = vcmask 7168
    %44 = vst.msk [vmem:[%s2] sm:$0xff] %vm43, %v42
    // Predicated region
    $region18: #{tpu_custom_call.1} parent=1 // pred_check
      _
    $region19: #{tpu_custom_call.1} parent=1 // pred_check_branch
      %46 = sbr.rel (0) target = $region21
    $region20: #{tpu_custom_call.1} parent=1 // pred_region
      _
    $region21: #{tpu_custom_call.1} parent=1 // pred_fallthru
      _
    // Predicated region
    $region22: #{tpu_custom_call.1} parent=1 // pred_check
      _
    $region23: #{tpu_custom_call.1} parent=1 // pred_check_branch
      %48 = sbr.rel (0) target = $region25
    $region24: #{tpu_custom_call.1} parent=1 // pred_region
      _
    $region25: #{tpu_custom_call.1} parent=1 // pred_fallthru
      _
    %49 = vsyncpa [#allocation3], 1
    %50 = vsyncpa [#allocation5], 1

</llo_original>
